<compile_context>
chip_gen: v7x
topology: tpu7x:2x2x1
jax: 0.10.0
libtpu: 0.0.40
codegen_flags: <defaults>
</compile_context>

<pallas_src>
import jax
import jax.numpy as jnp
from jax.experimental import pallas as pl
from jax.experimental.pallas import tpu as pltpu


def _multiio_kernel(b1_ref, b2_ref, a_ref, b_ref):
    # Linear(W = kron(diag(2,3), I4)) applied to cat(batch1, batch2).flatten()
    # is exactly a per-element scale: first 4 elements * 2, last 4 * 3.
    # Pure VPU elementwise work — no MXU push/pop, no weight tile.
    a_ref[...] = b1_ref[...] * jnp.float32(2.0)
    b_ref[...] = b2_ref[...] * jnp.float32(3.0)


@jax.jit
def multiionet_forward(batch1: jnp.ndarray, batch2: jnp.ndarray):
    # Present each input as a (1, 4) f32 tile (full-array block, no padding).
    x1 = batch1.reshape(1, 4).astype(jnp.float32)
    x2 = batch2.reshape(1, 4).astype(jnp.float32)

    vmem_spec = pl.BlockSpec(memory_space=pltpu.MemorySpace.VMEM)

    a2d, b2d = pl.pallas_call(
        _multiio_kernel,
        out_shape=(
            jax.ShapeDtypeStruct((1, 4), jnp.float32),
            jax.ShapeDtypeStruct((1, 4), jnp.float32),
        ),
        in_specs=[vmem_spec, vmem_spec],
        out_specs=(vmem_spec, vmem_spec),
    )(x1, x2)

    # Match torch: split(4) of the flattened linear output -> two length-4 vectors.
    return a2d.reshape(-1), b2d.reshape(-1)


def make_weight() -> jnp.ndarray:
    """Reference weight of the PyTorch module: kron([[2,0],[0,3]], eye(4))."""
    return jnp.kron(
        jnp.array([[2.0, 0.0], [0.0, 3.0]], dtype=jnp.float32),
        jnp.eye(4, dtype=jnp.float32),
    )


if __name__ == "__main__":
    key = jax.random.PRNGKey(0)
    k1, k2 = jax.random.split(key)
    # "mini-batch of input vectors of length 4" -> (1, 4) each (the 8x8 weight
    # in the module fixes the flattened length at 8).
    batch1 = jax.random.normal(k1, (1, 4), dtype=jnp.float32)
    batch2 = jax.random.normal(k2, (1, 4), dtype=jnp.float32)

    a, b = multiionet_forward(batch1, batch2)
    a = jax.block_until_ready(a)
    b = jax.block_until_ready(b)

    # Reference 1: closed form (a == 2*batch1.flatten(), b == 3*batch2.flatten()).
    ref_a = 2.0 * batch1.reshape(-1)
    ref_b = 3.0 * batch2.reshape(-1)
    # Reference 2: the literal PyTorch computation (cat -> flatten -> x @ W.T -> split).
    W = make_weight()
    y = jnp.concatenate([batch1, batch2], axis=0).reshape(-1) @ W.T
    ref_a2, ref_b2 = y[:4], y[4:]

    assert a.shape == (4,) and b.shape == (4,)
    assert jnp.allclose(a, ref_a, atol=1e-6), (a, ref_a)
    assert jnp.allclose(b, ref_b, atol=1e-6), (b, ref_b)
    assert jnp.allclose(a, ref_a2, atol=1e-6), (a, ref_a2)
    assert jnp.allclose(b, ref_b2, atol=1e-6), (b, ref_b2)

    print("KERNEL_OK")
</pallas_src>

<mosaic_0001>
module attributes {stable_mosaic.version = 11 : i64} {
  func.func @_multiio_kernel(%arg0: memref<1x4xf32, #tpu.memory_space<vmem>>, %arg1: memref<1x4xf32, #tpu.memory_space<vmem>>, %arg2: memref<1x4xf32, #tpu.memory_space<vmem>>, %arg3: memref<1x4xf32, #tpu.memory_space<vmem>>) attributes {dimension_semantics = [], scalar_prefetch = 0 : i64, scratch_operands = 0 : i64, tpu.core_type = #tpu.core_type<tc>} {
    %c0 = arith.constant 0 : index
    %c0_0 = arith.constant 0 : index
    %0 = vector.load %arg0[%c0, %c0_0] : memref<1x4xf32, #tpu.memory_space<vmem>>, vector<1x4xf32>
    %cst = arith.constant 2.000000e+00 : f32
    %1 = vector.broadcast %cst : f32 to vector<1x4xf32>
    %2 = arith.mulf %0, %1 : vector<1x4xf32>
    %c0_1 = arith.constant 0 : index
    %c0_2 = arith.constant 0 : index
    %3 = vector.load %arg2[%c0_1, %c0_2] : memref<1x4xf32, #tpu.memory_space<vmem>>, vector<1x4xf32>
    tpu.vector_store %arg2[%c0_1, %c0_2], %2 {strides = array<i32>} : memref<1x4xf32, #tpu.memory_space<vmem>>, vector<1x4xf32>,
    %c0_3 = arith.constant 0 : index
    %c0_4 = arith.constant 0 : index
    %4 = vector.load %arg1[%c0_3, %c0_4] : memref<1x4xf32, #tpu.memory_space<vmem>>, vector<1x4xf32>
    %cst_5 = arith.constant 3.000000e+00 : f32
    %5 = vector.broadcast %cst_5 : f32 to vector<1x4xf32>
    %6 = arith.mulf %4, %5 : vector<1x4xf32>
    %c0_6 = arith.constant 0 : index
    %c0_7 = arith.constant 0 : index
    %7 = vector.load %arg3[%c0_6, %c0_7] : memref<1x4xf32, #tpu.memory_space<vmem>>, vector<1x4xf32>
    tpu.vector_store %arg3[%c0_6, %c0_7], %6 {strides = array<i32>} : memref<1x4xf32, #tpu.memory_space<vmem>>, vector<1x4xf32>,
    return
  }
}

</mosaic_0001>

<llo_original>
// kernel: multiionet_forward.1
$region0: #{multiionet_forward.1}
  #allocation0 [shape = 'u32[]', space=smem, size = 0x4, offset = 0x4, fixed_abs, tag = 'smem constant byte address 0x4 - core index']
  #allocation1 [shape = 'u32[144,128]{1,0:T(1,128)}', space=vmem, size = 0x12000, scoped, tag = 'internal scratch']
  %s0 = inlined_call_operand.hbm [shape: f32[1,4], index: 0, kind: input, shape index: {}]
  %s1 = inlined_call_operand.vmem [shape: f32[1,4], index: 1, kind: input, shape index: {}]
  %s2 = inlined_call_operand.hbm [shape: f32[1,4], index: 2, kind: output, shape index: {0}]
  %s3 = inlined_call_operand.hbm [shape: f32[1,4], index: 3, kind: output, shape index: {1}]
  %4 = xla_tuple %s2, %s3
  %s5 = sld [smem:[#allocation0]]
  $region30: #{multiionet_forward.1} parent=0
    _
  %s7 = ssub.s32 1, %s5
  %s8 = scalar_select 0, %s7, %s5
  $region1: #{multiionet_forward.1} parent=0
    #allocation2 [shape = 'u8[512]{0}', space=vmem, size = 0x400, scoped, tag = 'input window, operand 0, single buffered']
    #allocation3 [shape = 's32[1]{0}', space=sflag, size = 0x4, scoped, tag = 'scoped memory for multiionet_forward.1']
    #allocation4 [shape = 's32[1]{0}', space=sflag, size = 0x4, scoped, tag = 'scoped memory for multiionet_forward.1']
    #allocation5 [shape = 'u8[512]{0}', space=vmem, size = 0x400, scoped, tag = 'output window, operand 0, single buffered']
    #allocation6 [shape = 'u8[512]{0}', space=vmem, size = 0x400, scoped, tag = 'output window, operand 1, single buffered']
    #allocation7 [shape = 's32[1]{0}', space=sflag, size = 0x4, scoped, tag = 'scoped memory for multiionet_forward.1']
    %9 = vsyncpa [#allocation3], 0
    %10 = vsyncpa [#allocation4], 0
    %11 = vsyncpa [#allocation7], 0
    // Predicated region
    $region2: #{multiionet_forward.1} parent=1 // pred_check
      _
    $region3: #{multiionet_forward.1} parent=1 // pred_check_branch
      %13 = sbr.rel (0) target = $region5
    $region4: #{multiionet_forward.1} parent=1 // pred_region
      %s15 = ssub.s32 16, 16
      %16 = vsyncadd [#allocation3], %s15
      %s18 = sshll.u32 [#allocation2], 4
      %s19 = int_to_ptr.vmem [resolvable:$true] %s18
      %21 = dma.hbm_to_vmem [thread:$0]  %s0, 16, %s19, [#allocation3]
    $region5: #{multiionet_forward.1} parent=1 // pred_fallthru
      _
    // Predicated region
    $region6: #{multiionet_forward.1} parent=1 // pred_check
      _
    $region7: #{multiionet_forward.1} parent=1 // pred_check_branch
      %23 = sbr.rel (0) target = $region9
    $region8: #{multiionet_forward.1} parent=1 // pred_region
      _
    $region9: #{multiionet_forward.1} parent=1 // pred_fallthru
      _
    // Predicated region
    $region10: #{multiionet_forward.1} parent=1 // pred_check
      _
    $region11: #{multiionet_forward.1} parent=1 // pred_check_branch
      %25 = sbr.rel (0) target = $region13
    $region12: #{multiionet_forward.1} parent=1 // pred_region
      %26 = dma.done [#allocation3], 16
    $region13: #{multiionet_forward.1} parent=1 // pred_fallthru
      _
    %v27 = vld [vmem:[#allocation2] sm:$0x1]
    %v28 = vmul.f32 %v27, 2.0
    %vm29 = vcmask 24576
    %30 = vst.msk [vmem:[#allocation5] sm:$0x1] %vm29, %v28
    %v31 = vld [vmem:[%s1] sm:$0x1]
    %v32 = vmul.f32 %v31, 3.0
    %33 = vst.msk [vmem:[#allocation6] sm:$0x1] %vm29, %v32
    // Predicated region
    $region14: #{multiionet_forward.1} parent=1 // pred_check
      _
    $region15: #{multiionet_forward.1} parent=1 // pred_check_branch
      %35 = sbr.rel (0) target = $region17
    $region16: #{multiionet_forward.1} parent=1 // pred_region
      %s37 = ssub.s32 16, 16
      %38 = vsyncadd [#allocation4], %s37
      %s40 = sshll.u32 [#allocation5], 4
      %s41 = int_to_ptr.vmem [resolvable:$true] %s40
      %43 = dma.vmem_to_hbm [thread:$0]  %s41, 16, %s2, [#allocation4]
    $region17: #{multiionet_forward.1} parent=1 // pred_fallthru
      _
    // Predicated region
    $region18: #{multiionet_forward.1} parent=1 // pred_check
      _
    $region19: #{multiionet_forward.1} parent=1 // pred_check_branch
      %45 = sbr.rel (0) target = $region21
    $region20: #{multiionet_forward.1} parent=1 // pred_region
      %s47 = ssub.s32 16, 16
      %48 = vsyncadd [#allocation7], %s47
      %s50 = sshll.u32 [#allocation6], 4
      %s51 = int_to_ptr.vmem [resolvable:$true] %s50
      %53 = dma.vmem_to_hbm [thread:$0]  %s51, 16, %s3, [#allocation7]
    $region21: #{multiionet_forward.1} parent=1 // pred_fallthru
      _
    // Predicated region
    $region22: #{multiionet_forward.1} parent=1 // pred_check
      _
    $region23: #{multiionet_forward.1} parent=1 // pred_check_branch
      %55 = sbr.rel (0) target = $region25
    $region24: #{multiionet_forward.1} parent=1 // pred_region
      %56 = dma.done [#allocation4], 16
    $region25: #{multiionet_forward.1} parent=1 // pred_fallthru
      _
    // Predicated region
    $region26: #{multiionet_forward.1} parent=1 // pred_check
      _
    $region27: #{multiionet_forward.1} parent=1 // pred_check_branch
      %58 = sbr.rel (0) target = $region29
    $region28: #{multiionet_forward.1} parent=1 // pred_region
      %59 = dma.done [#allocation7], 16
    $region29: #{multiionet_forward.1} parent=1 // pred_fallthru
      _
    %60 = vsyncpa [#allocation3], 1
    %61 = vsyncpa [#allocation4], 1
    %62 = vsyncpa [#allocation7], 1

</llo_original>
